<compile_context>
chip_gen: v7x
topology: tpu7x:2x2x1
jax: 0.10.0
libtpu: 0.0.40
codegen_flags: <defaults>
</compile_context>

<pallas_src>
import jax
import jax.numpy as jnp
from jax.experimental import pallas as pl
from jax.experimental.pallas import tpu as pltpu

# ------------------------- model dims (small, synthetic) -------------------------
B = 2            # batch
T = 16           # sequence length
H = 32           # hidden_size
K = 3            # conv_kernel_size (odd -> "same" length output)
PAD = K // 2
EPS = 1e-5       # torch.nn.LayerNorm default eps

R = B * T                        # rows handled in the single grid step
CW = max(H, R)                   # lane width of the packed constants buffer
C_ROWS = 8 + 2 * R               # rows: 8 packed params, R identity, R masks


# ------------------------------- Pallas kernel -----------------------------------
def duration_predictor_kernel(x_ref, w1c_ref, w2c_ref, c_ref, o_ref):
    """Whole forward pass in one grid step.

    x_ref  : (R, H)      input rows (row = (batch, time), hidden on lanes)
    w1c_ref: (H, K*H)    conv1 weight, taps concatenated on output lanes
    w2c_ref: (H, K*H)    conv2 weight, same layout
    c_ref  : (C_ROWS,CW) packed constants:
               row 0: conv1 bias        row 1: ln1 gamma      row 2: ln1 beta
               row 3: conv2 bias        row 4: ln2 gamma*w_l  row 5: ln2 beta*w_l + b_l/H
               rows 8..8+R-1   [:, :R]  : identity (row->lane scatter)
               rows 8+R..8+2R-1, col 0  : mask (0 at sequence starts, else 1)
               rows 8+R..8+2R-1, col 1  : mask (0 at sequence ends,   else 1)
    o_ref  : (1, R)      lane-dense output row (B*T lanes, one store)
    """
    b1 = c_ref[0:1, :H]
    g1 = c_ref[1:2, :H]
    be1 = c_ref[2:3, :H]
    b2 = c_ref[3:4, :H]
    g2w = c_ref[4:5, :H]
    be2w = c_ref[5:6, :H]
    eye = c_ref[8:8 + R, :R]                       # (R, R)
    m_first = c_ref[8 + R:8 + 2 * R, 0:1]          # (R, 1)
    m_last = c_ref[8 + R:8 + 2 * R, 1:2]           # (R, 1)

    def conv_relu_ln(h_in, wc_ref, bias, gamma, beta):
        # One fused MXU matmul for all K taps, then XLU rolls + boundary masks.
        y = jnp.dot(h_in, wc_ref[...], preferred_element_type=jnp.float32)  # (R, K*H)
        h = (y[:, H:2 * H]
             + m_first * pltpu.roll(y[:, 0:H], shift=1, axis=0)        # tap k=0 -> x[t-1]
             + m_last * pltpu.roll(y[:, 2 * H:3 * H], shift=R - 1, axis=0)  # tap k=2 -> x[t+1]
             + bias)
        h = jnp.maximum(h, 0.0)
        # LayerNorm, one-pass statistics, variance clamped at 0.
        mean = jnp.mean(h, axis=-1, keepdims=True)
        var = jnp.maximum(jnp.mean(h * h, axis=-1, keepdims=True) - mean * mean, 0.0)
        scale = gamma * jax.lax.rsqrt(var + EPS)
        return h * scale + (beta - mean * scale)

    h = conv_relu_ln(x_ref[...], w1c_ref, b1, g1, be1)
    # LayerNorm2 has the Linear(H->1) weight/bias folded into gamma/beta.
    h = conv_relu_ln(h, w2c_ref, b2, g2w, be2w)

    # Linear(H->1) is now a plain row-sum -> MXU matmul against ones.
    col = jnp.dot(h, jnp.ones((H, 1), jnp.float32),
                  preferred_element_type=jnp.float32)                  # (R, 1)
    # Scatter the column onto the diagonal and collapse rows with one MXU
    # matmul -> a single lane-dense (1, R) output row.
    scat = col * eye                                                   # (R, R)
    o_ref[...] = jnp.dot(jnp.ones((1, R), jnp.float32), scat,
                         preferred_element_type=jnp.float32)           # (1, R)


# --------------------------------- wrapper ----------------------------------------
@jax.jit
def duration_predictor(x, params):
    """x: (B, T, H) float32 -> (B, T) float32."""
    w1, b1, w2, b2, g1, be1, g2, be2, wl, bl = params

    x2d = x.reshape(R, H)                                  # free reshape, 1x HBM traffic

    # Conv weights with taps concatenated along output lanes: y = x @ wc gives
    # y[:, k*H:(k+1)*H] = x @ w[k].
    w1c = jnp.concatenate([w1[k] for k in range(K)], axis=1)   # (H, K*H)
    w2c = jnp.concatenate([w2[k] for k in range(K)], axis=1)   # (H, K*H)

    # Packed constants buffer (one DMA): params, scatter identity, boundary masks.
    def pad_lanes(a):
        return jnp.pad(a, ((0, 0), (0, CW - a.shape[1])))

    pmat = jnp.concatenate(
        [b1, g1, be1, b2,
         g2 * wl,                               # LN2 gamma  * Linear weight
         be2 * wl + bl[0, 0] / H,               # LN2 beta   * Linear weight + bias/H
         jnp.zeros((2, H), jnp.float32)], axis=0)              # (8, H)
    eye = jnp.eye(R, dtype=jnp.float32)                        # (R, R)
    pos = jnp.arange(R) % T
    m_first = (pos != 0).astype(jnp.float32)[:, None]          # zero at sequence starts
    m_last = (pos != T - 1).astype(jnp.float32)[:, None]       # zero at sequence ends
    mcols = jnp.concatenate(
        [m_first, m_last, jnp.zeros((R, CW - 2), jnp.float32)], axis=1)
    cbuf = jnp.concatenate([pad_lanes(pmat), pad_lanes(eye), mcols], axis=0)

    out = pl.pallas_call(
        duration_predictor_kernel,
        out_shape=jax.ShapeDtypeStruct((1, R), jnp.float32),
        grid_spec=pltpu.PrefetchScalarGridSpec(
            num_scalar_prefetch=0,
            grid=(1,),                                         # whole batch, one step
            in_specs=[
                pl.BlockSpec((R, H), lambda i: (0, 0)),        # x rows
                pl.BlockSpec((H, K * H), lambda i: (0, 0)),    # conv1 weight (fused taps)
                pl.BlockSpec((H, K * H), lambda i: (0, 0)),    # conv2 weight (fused taps)
                pl.BlockSpec((C_ROWS, CW), lambda i: (0, 0)),  # packed constants
            ],
            out_specs=pl.BlockSpec((1, R), lambda i: (0, 0)),  # lane-dense row
        ),
        compiler_params=pltpu.CompilerParams(
            dimension_semantics=("arbitrary",)),
    )(x2d, w1c, w2c, cbuf)
    return out.reshape(B, T)


# ------------------------------ pure-JAX reference ---------------------------------
def reference(x, params):
    w1, b1, w2, b2, g1, be1, g2, be2, wl, bl = params

    def conv_relu(h, w, b):                            # h: (B,T,H); w: (K,H,H)
        hp = jnp.pad(h, ((0, 0), (PAD, PAD), (0, 0)))
        out = jnp.broadcast_to(b, (B, T, H))
        for k in range(K):
            out = out + jnp.einsum("bti,io->bto", hp[:, k:k + T, :], w[k])
        return jnp.maximum(out, 0.0)

    def ln(h, g, be):
        m = jnp.mean(h, -1, keepdims=True)
        v = jnp.mean((h - m) ** 2, -1, keepdims=True)
        return (h - m) / jnp.sqrt(v + EPS) * g + be

    h = ln(conv_relu(x, w1, b1), g1, be1)
    h = ln(conv_relu(h, w2, b2), g2, be2)
    return jnp.sum(h * wl, -1) + bl[0, 0]


# ----------------------------------- main ------------------------------------------
if __name__ == "__main__":
    key = jax.random.PRNGKey(0)
    ks = jax.random.split(key, 12)

    # Deterministic synthetic parameters (shapes per nn.Module __init__).
    # Conv weights are prepared in (K, C_in, C_out) layout for the kernel
    # (PyTorch Conv1d weight is (C_out, C_in, K)).
    w1 = jax.random.normal(ks[0], (K, H, H), jnp.float32) * 0.1
    b1 = jax.random.normal(ks[1], (1, H), jnp.float32) * 0.1
    w2 = jax.random.normal(ks[2], (K, H, H), jnp.float32) * 0.1
    b2 = jax.random.normal(ks[3], (1, H), jnp.float32) * 0.1
    g1 = 1.0 + 0.1 * jax.random.normal(ks[4], (1, H), jnp.float32)
    be1 = 0.1 * jax.random.normal(ks[5], (1, H), jnp.float32)
    g2 = 1.0 + 0.1 * jax.random.normal(ks[6], (1, H), jnp.float32)
    be2 = 0.1 * jax.random.normal(ks[7], (1, H), jnp.float32)
    wl = jax.random.normal(ks[8], (1, H), jnp.float32) * 0.1
    bl = jax.random.normal(ks[9], (1, 1), jnp.float32) * 0.1
    params = (w1, b1, w2, b2, g1, be1, g2, be2, wl, bl)

    x = jax.random.normal(ks[10], (B, T, H), jnp.float32)

    out = jax.block_until_ready(duration_predictor(x, params))
    ref = reference(x, params)

    assert out.shape == (B, T), out.shape
    assert jnp.allclose(out, ref, atol=1e-4, rtol=1e-4), (
        float(jnp.max(jnp.abs(out - ref))))
    print("KERNEL_OK")
</pallas_src>

<mosaic_0001>
module attributes {stable_mosaic.version = 11 : i64} {
  func.func @duration_predictor_kernel(%arg0: i32, %arg1: memref<32x32xf32, #tpu.memory_space<vmem>>, %arg2: memref<32x96xf32, #tpu.memory_space<vmem>>, %arg3: memref<32x96xf32, #tpu.memory_space<vmem>>, %arg4: memref<72x32xf32, #tpu.memory_space<vmem>>, %arg5: memref<1x32xf32, #tpu.memory_space<vmem>>) attributes {dimension_semantics = [#tpu.dimension_semantics<arbitrary>], iteration_bounds = array<i64: 1>, scalar_prefetch = 0 : i64, scratch_operands = 0 : i64, tpu.core_type = #tpu.core_type<tc>, window_params = [{pipeline_mode = #tpu.pipeline_mode<synchronous>, transform_indices = @transform_0, window_bounds = array<i64: 32, 32>}, {pipeline_mode = #tpu.pipeline_mode<synchronous>, transform_indices = @transform_1, window_bounds = array<i64: 32, 96>}, {pipeline_mode = #tpu.pipeline_mode<synchronous>, transform_indices = @transform_2, window_bounds = array<i64: 32, 96>}, {pipeline_mode = #tpu.pipeline_mode<synchronous>, transform_indices = @transform_3, window_bounds = array<i64: 72, 32>}, {pipeline_mode = #tpu.pipeline_mode<synchronous>, transform_indices = @transform_4, window_bounds = array<i64: 1, 32>}]} {
    %c0 = arith.constant 0 : index
    %c0_0 = arith.constant 0 : index
    %0 = vector.load %arg4[%c0, %c0_0] : memref<72x32xf32, #tpu.memory_space<vmem>>, vector<1x32xf32>
    %c1 = arith.constant 1 : index
    %c0_1 = arith.constant 0 : index
    %1 = vector.load %arg4[%c1, %c0_1] : memref<72x32xf32, #tpu.memory_space<vmem>>, vector<1x32xf32>
    %c2 = arith.constant 2 : index
    %c0_2 = arith.constant 0 : index
    %2 = vector.load %arg4[%c2, %c0_2] : memref<72x32xf32, #tpu.memory_space<vmem>>, vector<1x32xf32>
    %c3 = arith.constant 3 : index
    %c0_3 = arith.constant 0 : index
    %3 = vector.load %arg4[%c3, %c0_3] : memref<72x32xf32, #tpu.memory_space<vmem>>, vector<1x32xf32>
    %c4 = arith.constant 4 : index
    %c0_4 = arith.constant 0 : index
    %4 = vector.load %arg4[%c4, %c0_4] : memref<72x32xf32, #tpu.memory_space<vmem>>, vector<1x32xf32>
    %c5 = arith.constant 5 : index
    %c0_5 = arith.constant 0 : index
    %5 = vector.load %arg4[%c5, %c0_5] : memref<72x32xf32, #tpu.memory_space<vmem>>, vector<1x32xf32>
    %c8 = arith.constant 8 : index
    %c0_6 = arith.constant 0 : index
    %6 = vector.load %arg4[%c8, %c0_6] : memref<72x32xf32, #tpu.memory_space<vmem>>, vector<32x32xf32>
    %c40 = arith.constant 40 : index
    %c0_7 = arith.constant 0 : index
    %7 = vector.load %arg4[%c40, %c0_7] : memref<72x32xf32, #tpu.memory_space<vmem>>, vector<32x1xf32>
    %c40_8 = arith.constant 40 : index
    %c1_9 = arith.constant 1 : index
    %8 = vector.load %arg4[%c40_8, %c1_9] : memref<72x32xf32, #tpu.memory_space<vmem>>, vector<32x1xf32>
    %c0_10 = arith.constant 0 : index
    %c0_11 = arith.constant 0 : index
    %9 = vector.load %arg1[%c0_10, %c0_11] : memref<32x32xf32, #tpu.memory_space<vmem>>, vector<32x32xf32>
    %c0_12 = arith.constant 0 : index
    %c0_13 = arith.constant 0 : index
    %10 = vector.load %arg2[%c0_12, %c0_13] : memref<32x96xf32, #tpu.memory_space<vmem>>, vector<32x96xf32>
    %cst = arith.constant dense<0.000000e+00> : vector<32x96xf32>
    %11 = tpu.matmul %9, %10, %cst {dimension_numbers = #tpu.dot_dimension_numbers<[1], [0], [0], [1], [0, 0, 1, 1], [], []>} : vector<32x32xf32>, vector<32x96xf32>, vector<32x96xf32> -> vector<32x96xf32>
    %12 = vector.extract_strided_slice %11 {offsets = [0, 32], sizes = [32, 32], strides = [1, 1]} : vector<32x96xf32> to vector<32x32xf32>
    %13 = vector.extract_strided_slice %11 {offsets = [0, 0], sizes = [32, 32], strides = [1, 1]} : vector<32x96xf32> to vector<32x32xf32>
    %c1_i32 = arith.constant 1 : i32
    %14 = tpu.dynamic_rotate %13 by %c1_i32 dim 0 : vector<32x32xf32>, i32 -> vector<32x32xf32>
    %15 = vector.broadcast %7 : vector<32x1xf32> to vector<32x32xf32>
    %16 = arith.mulf %15, %14 : vector<32x32xf32>
    %17 = arith.addf %12, %16 : vector<32x32xf32>
    %18 = vector.extract_strided_slice %11 {offsets = [0, 64], sizes = [32, 32], strides = [1, 1]} : vector<32x96xf32> to vector<32x32xf32>
    %c31_i32 = arith.constant 31 : i32
    %19 = tpu.dynamic_rotate %18 by %c31_i32 dim 0 : vector<32x32xf32>, i32 -> vector<32x32xf32>
    %20 = vector.broadcast %8 : vector<32x1xf32> to vector<32x32xf32>
    %21 = arith.mulf %20, %19 : vector<32x32xf32>
    %22 = arith.addf %17, %21 : vector<32x32xf32>
    %23 = vector.broadcast %0 : vector<1x32xf32> to vector<32x32xf32>
    %24 = arith.addf %22, %23 : vector<32x32xf32>
    %cst_14 = arith.constant 0.000000e+00 : f32
    %25 = vector.broadcast %cst_14 : f32 to vector<32x32xf32>
    %26 = arith.maximumf %24, %25 : vector<32x32xf32>
    %cst_15 = arith.constant dense<0.000000e+00> : vector<32xf32>
    %27 = vector.multi_reduction <add>, %26, %cst_15 [1] : vector<32x32xf32> to vector<32xf32>
    %28 = vector.shape_cast %27 : vector<32xf32> to vector<32x1xf32>
    %cst_16 = arith.constant 3.200000e+01 : f32
    %29 = vector.broadcast %cst_16 : f32 to vector<32x1xf32>
    %30 = arith.divf %28, %29 : vector<32x1xf32>
    %31 = arith.mulf %26, %26 : vector<32x32xf32>
    %cst_17 = arith.constant dense<0.000000e+00> : vector<32xf32>
    %32 = vector.multi_reduction <add>, %31, %cst_17 [1] : vector<32x32xf32> to vector<32xf32>
    %33 = vector.shape_cast %32 : vector<32xf32> to vector<32x1xf32>
    %cst_18 = arith.constant 3.200000e+01 : f32
    %34 = vector.broadcast %cst_18 : f32 to vector<32x1xf32>
    %35 = arith.divf %33, %34 : vector<32x1xf32>
    %36 = arith.mulf %30, %30 : vector<32x1xf32>
    %37 = arith.subf %35, %36 : vector<32x1xf32>
    %cst_19 = arith.constant 0.000000e+00 : f32
    %38 = vector.broadcast %cst_19 : f32 to vector<32x1xf32>
    %39 = arith.maximumf %37, %38 : vector<32x1xf32>
    %cst_20 = arith.constant 9.99999974E-6 : f32
    %40 = vector.broadcast %cst_20 : f32 to vector<32x1xf32>
    %41 = arith.addf %39, %40 : vector<32x1xf32>
    %42 = math.rsqrt %41 : vector<32x1xf32>
    %43 = vector.broadcast %1 : vector<1x32xf32> to vector<32x32xf32>
    %44 = vector.broadcast %42 : vector<32x1xf32> to vector<32x32xf32>
    %45 = arith.mulf %43, %44 : vector<32x32xf32>
    %46 = arith.mulf %26, %45 : vector<32x32xf32>
    %47 = vector.broadcast %30 : vector<32x1xf32> to vector<32x32xf32>
    %48 = arith.mulf %47, %45 : vector<32x32xf32>
    %49 = vector.broadcast %2 : vector<1x32xf32> to vector<32x32xf32>
    %50 = arith.subf %49, %48 : vector<32x32xf32>
    %51 = arith.addf %46, %50 : vector<32x32xf32>
    %c0_21 = arith.constant 0 : index
    %c0_22 = arith.constant 0 : index
    %52 = vector.load %arg3[%c0_21, %c0_22] : memref<32x96xf32, #tpu.memory_space<vmem>>, vector<32x96xf32>
    %cst_23 = arith.constant dense<0.000000e+00> : vector<32x96xf32>
    %53 = tpu.matmul %51, %52, %cst_23 {dimension_numbers = #tpu.dot_dimension_numbers<[1], [0], [0], [1], [0, 0, 1, 1], [], []>} : vector<32x32xf32>, vector<32x96xf32>, vector<32x96xf32> -> vector<32x96xf32>
    %54 = vector.extract_strided_slice %53 {offsets = [0, 32], sizes = [32, 32], strides = [1, 1]} : vector<32x96xf32> to vector<32x32xf32>
    %55 = vector.extract_strided_slice %53 {offsets = [0, 0], sizes = [32, 32], strides = [1, 1]} : vector<32x96xf32> to vector<32x32xf32>
    %c1_i32_24 = arith.constant 1 : i32
    %56 = tpu.dynamic_rotate %55 by %c1_i32_24 dim 0 : vector<32x32xf32>, i32 -> vector<32x32xf32>
    %57 = vector.broadcast %7 : vector<32x1xf32> to vector<32x32xf32>
    %58 = arith.mulf %57, %56 : vector<32x32xf32>
    %59 = arith.addf %54, %58 : vector<32x32xf32>
    %60 = vector.extract_strided_slice %53 {offsets = [0, 64], sizes = [32, 32], strides = [1, 1]} : vector<32x96xf32> to vector<32x32xf32>
    %c31_i32_25 = arith.constant 31 : i32
    %61 = tpu.dynamic_rotate %60 by %c31_i32_25 dim 0 : vector<32x32xf32>, i32 -> vector<32x32xf32>
    %62 = vector.broadcast %8 : vector<32x1xf32> to vector<32x32xf32>
    %63 = arith.mulf %62, %61 : vector<32x32xf32>
    %64 = arith.addf %59, %63 : vector<32x32xf32>
    %65 = vector.broadcast %3 : vector<1x32xf32> to vector<32x32xf32>
    %66 = arith.addf %64, %65 : vector<32x32xf32>
    %cst_26 = arith.constant 0.000000e+00 : f32
    %67 = vector.broadcast %cst_26 : f32 to vector<32x32xf32>
    %68 = arith.maximumf %66, %67 : vector<32x32xf32>
    %cst_27 = arith.constant dense<0.000000e+00> : vector<32xf32>
    %69 = vector.multi_reduction <add>, %68, %cst_27 [1] : vector<32x32xf32> to vector<32xf32>
    %70 = vector.shape_cast %69 : vector<32xf32> to vector<32x1xf32>
    %cst_28 = arith.constant 3.200000e+01 : f32
    %71 = vector.broadcast %cst_28 : f32 to vector<32x1xf32>
    %72 = arith.divf %70, %71 : vector<32x1xf32>
    %73 = arith.mulf %68, %68 : vector<32x32xf32>
    %cst_29 = arith.constant dense<0.000000e+00> : vector<32xf32>
    %74 = vector.multi_reduction <add>, %73, %cst_29 [1] : vector<32x32xf32> to vector<32xf32>
    %75 = vector.shape_cast %74 : vector<32xf32> to vector<32x1xf32>
    %cst_30 = arith.constant 3.200000e+01 : f32
    %76 = vector.broadcast %cst_30 : f32 to vector<32x1xf32>
    %77 = arith.divf %75, %76 : vector<32x1xf32>
    %78 = arith.mulf %72, %72 : vector<32x1xf32>
    %79 = arith.subf %77, %78 : vector<32x1xf32>
    %cst_31 = arith.constant 0.000000e+00 : f32
    %80 = vector.broadcast %cst_31 : f32 to vector<32x1xf32>
    %81 = arith.maximumf %79, %80 : vector<32x1xf32>
    %cst_32 = arith.constant 9.99999974E-6 : f32
    %82 = vector.broadcast %cst_32 : f32 to vector<32x1xf32>
    %83 = arith.addf %81, %82 : vector<32x1xf32>
    %84 = math.rsqrt %83 : vector<32x1xf32>
    %85 = vector.broadcast %4 : vector<1x32xf32> to vector<32x32xf32>
    %86 = vector.broadcast %84 : vector<32x1xf32> to vector<32x32xf32>
    %87 = arith.mulf %85, %86 : vector<32x32xf32>
    %88 = arith.mulf %68, %87 : vector<32x32xf32>
    %89 = vector.broadcast %72 : vector<32x1xf32> to vector<32x32xf32>
    %90 = arith.mulf %89, %87 : vector<32x32xf32>
    %91 = vector.broadcast %5 : vector<1x32xf32> to vector<32x32xf32>
    %92 = arith.subf %91, %90 : vector<32x32xf32>
    %93 = arith.addf %88, %92 : vector<32x32xf32>
    %cst_33 = arith.constant 1.000000e+00 : f32
    %94 = vector.broadcast %cst_33 : f32 to vector<32x1xf32>
    %cst_34 = arith.constant dense<0.000000e+00> : vector<32x1xf32>
    %95 = tpu.matmul %93, %94, %cst_34 {dimension_numbers = #tpu.dot_dimension_numbers<[1], [0], [0], [1], [0, 0, 1, 1], [], []>} : vector<32x32xf32>, vector<32x1xf32>, vector<32x1xf32> -> vector<32x1xf32>
    %96 = vector.broadcast %95 : vector<32x1xf32> to vector<32x32xf32>
    %97 = arith.mulf %96, %6 : vector<32x32xf32>
    %cst_35 = arith.constant 1.000000e+00 : f32
    %98 = vector.broadcast %cst_35 : f32 to vector<1x32xf32>
    %cst_36 = arith.constant dense<0.000000e+00> : vector<1x32xf32>
    %99 = tpu.matmul %98, %97, %cst_36 {dimension_numbers = #tpu.dot_dimension_numbers<[1], [0], [0], [1], [0, 0, 1, 1], [], []>} : vector<1x32xf32>, vector<32x32xf32>, vector<1x32xf32> -> vector<1x32xf32>
    %c0_37 = arith.constant 0 : index
    %c0_38 = arith.constant 0 : index
    %100 = vector.load %arg5[%c0_37, %c0_38] : memref<1x32xf32, #tpu.memory_space<vmem>>, vector<1x32xf32>
    tpu.vector_store %arg5[%c0_37, %c0_38], %99 {strides = array<i32>} : memref<1x32xf32, #tpu.memory_space<vmem>>, vector<1x32xf32>,
    return
  }
  func.func @transform_0(%arg0: i32) -> (i32, i32) {
    %c0_i32 = arith.constant 0 : i32
    %c0_i32_0 = arith.constant 0 : i32
    %c0_i32_1 = arith.constant 0 : i32
    return %c0_i32, %c0_i32_0 : i32, i32
  }
  func.func @transform_1(%arg0: i32) -> (i32, i32) {
    %c0_i32 = arith.constant 0 : i32
    %c0_i32_0 = arith.constant 0 : i32
    %c0_i32_1 = arith.constant 0 : i32
    return %c0_i32, %c0_i32_0 : i32, i32
  }
  func.func @transform_2(%arg0: i32) -> (i32, i32) {
    %c0_i32 = arith.constant 0 : i32
    %c0_i32_0 = arith.constant 0 : i32
    %c0_i32_1 = arith.constant 0 : i32
    return %c0_i32, %c0_i32_0 : i32, i32
  }
  func.func @transform_3(%arg0: i32) -> (i32, i32) {
    %c0_i32 = arith.constant 0 : i32
    %c0_i32_0 = arith.constant 0 : i32
    %c0_i32_1 = arith.constant 0 : i32
    return %c0_i32, %c0_i32_0 : i32, i32
  }
  func.func @transform_4(%arg0: i32) -> (i32, i32) {
    %c0_i32 = arith.constant 0 : i32
    %c0_i32_0 = arith.constant 0 : i32
    %c0_i32_1 = arith.constant 0 : i32
    return %c0_i32, %c0_i32_0 : i32, i32
  }
}

</mosaic_0001>

<llo_original>
// kernel: duration_predictor.1
$region0: #{duration_predictor.1}
  #allocation0 [shape = 'u32[]', space=smem, size = 0x4, offset = 0x4, fixed_abs, tag = 'smem constant byte address 0x4 - core index']
  #allocation1 [shape = 'u32[144,128]{1,0:T(1,128)}', space=vmem, size = 0x12000, scoped, tag = 'internal scratch']
  %s0 = inlined_call_operand.vmem [shape: f32[32,32], index: 0, kind: input, shape index: {}]
  %s1 = inlined_call_operand.vmem [shape: f32[32,96], index: 1, kind: input, shape index: {}]
  %s2 = inlined_call_operand.vmem [shape: f32[32,96], index: 2, kind: input, shape index: {}]
  %s3 = inlined_call_operand.vmem [shape: f32[72,32], index: 3, kind: input, shape index: {}]
  %s4 = inlined_call_operand.vmem [shape: f32[1,32], index: 4, kind: output, shape index: {}]
  %s5 = sld [smem:[#allocation0]]
  $region26: #{duration_predictor.1} parent=0
    _
  %s7 = ssub.s32 1, %s5
  %s8 = scalar_select 0, %s7, %s5
  // Predicated region
  $region2: #{duration_predictor.1} parent=0 // pred_check
    _
  $region3: #{duration_predictor.1} parent=0 // pred_check_branch
    %10 = sbr.rel (0) target = $region5
  $region4: #{duration_predictor.1} parent=0 // pred_region
    _
  $region5: #{duration_predictor.1} parent=0 // pred_fallthru
    _
  // Predicated region
  $region6: #{duration_predictor.1} parent=0 // pred_check
    _
  $region7: #{duration_predictor.1} parent=0 // pred_check_branch
    %12 = sbr.rel (0) target = $region9
  $region8: #{duration_predictor.1} parent=0 // pred_region
    _
  $region9: #{duration_predictor.1} parent=0 // pred_fallthru
    _
  // Predicated region
  $region10: #{duration_predictor.1} parent=0 // pred_check
    _
  $region11: #{duration_predictor.1} parent=0 // pred_check_branch
    %14 = sbr.rel (0) target = $region13
  $region12: #{duration_predictor.1} parent=0 // pred_region
    _
  $region13: #{duration_predictor.1} parent=0 // pred_fallthru
    _
  // Predicated region
  $region14: #{duration_predictor.1} parent=0 // pred_check
    _
  $region15: #{duration_predictor.1} parent=0 // pred_check_branch
    %16 = sbr.rel (0) target = $region17
  $region16: #{duration_predictor.1} parent=0 // pred_region
    _
  $region17: #{duration_predictor.1} parent=0 // pred_fallthru
    _
  %v17 = vld [vmem:[%s3] sm:$0x1]
  %v18 = vld [vmem:[%s3 + $0x1] sm:$0x1]
  %v19 = vld [vmem:[%s3 + $0x2] sm:$0x1]
  %v20 = vld [vmem:[%s3 + $0x3] sm:$0x1]
  %v21 = vld [vmem:[%s3 + $0x4] sm:$0x1]
  %v22 = vld [vmem:[%s3 + $0x5] sm:$0x1]
  %v23 = vld [vmem:[%s3 + $0x8] sm:$0xff]
  %v24 = vld [vmem:[%s3 + $0x10] sm:$0xff]
  %v25 = vld [vmem:[%s3 + $0x18] sm:$0xff]
  %v26 = vld [vmem:[%s3 + $0x20] sm:$0xff]
  %v27 = vld [vmem:[%s3 + $0x28] sm:$0xff]
  %v28 = vld [vmem:[%s3 + $0x30] sm:$0xff]
  %v29 = vld [vmem:[%s3 + $0x38] sm:$0xff]
  %v30 = vld [vmem:[%s3 + $0x40] sm:$0xff]
  %v31 = vld [vmem:[%s0] sm:$0xff]
  %v32 = vld [vmem:[%s0 + $0x8] sm:$0xff]
  %v33 = vld [vmem:[%s0 + $0x10] sm:$0xff]
  %v34 = vld [vmem:[%s0 + $0x18] sm:$0xff]
  %v35 = vld [vmem:[%s1] sm:$0xff]
  %v36 = vld [vmem:[%s1 + $0x8] sm:$0xff]
  %v37 = vld [vmem:[%s1 + $0x10] sm:$0xff]
  %v38 = vld [vmem:[%s1 + $0x18] sm:$0xff]
  %vm39 = vcmask 261120
  %v41 = vsel %vm39, %v31, 0
  %v44 = vsel %vm39, %v32, 0
  %v47 = vsel %vm39, %v33, 0
  %v50 = vsel %vm39, %v34, 0
  %52 = vmatprep.subr.mxu0 0.0
  %53 = vmatpush1.msra.mxu0 %v35
  %54 = vmatprep.subr.mxu0 0.0
  %55 = vmatpush1.msra.mxu0 %v36
  %56 = vmatprep.subr.mxu0 0.0
  %57 = vmatpush1.msra.mxu0 %v37
  %58 = vmatprep.subr.mxu0 0.0
  %59 = vmatpush1.msra.mxu0 %v38
  %60 = vmatprep.subr.mxu0 0.0
  %61 = vmatpush1.msra.mxu0 0.0
  %62 = vmatprep.subr.mxu0 0.0
  %63 = vmatpush1.msra.mxu0 0.0
  %64 = vmatprep.subr.mxu0 0.0
  %65 = vmatpush1.msra.mxu0 0.0
  %66 = vmatprep.subr.mxu0 0.0
  %67 = vmatpush1.msra.mxu0 0.0
  %68 = vmatprep.subr.mxu0 0.0
  %69 = vmatpush1.msra.mxu0 0.0
  %70 = vmatprep.subr.mxu0 0.0
  %71 = vmatpush1.msra.mxu0 0.0
  %72 = vmatprep.subr.mxu0 0.0
  %73 = vmatpush1.msra.mxu0 0.0
  %74 = vmatprep.subr.mxu0 0.0
  %75 = vmatpush1.msra.mxu0 0.0
  %76 = vmatprep.subr.mxu0 0.0
  %77 = vmatpush1.msra.mxu0 0.0
  %78 = vmatprep.subr.mxu0 0.0
  %79 = vmatpush1.msra.mxu0 0.0
  %80 = vmatprep.subr.mxu0 0.0
  %81 = vmatpush1.msra.mxu0 0.0
  %82 = vmatprep.subr.mxu0 0.0
  %83 = vmatpush1.msra.mxu0 0.0
  %84 = vmatprep.subr.mxu0 0.0
  %85 = vmatpush1.msra.mxu0 0.0
  %86 = vmatprep.subr.mxu0 0.0
  %87 = vmatpush1.msra.mxu0 0.0
  %88 = vmatprep.subr.mxu0 0.0
  %89 = vmatpush1.msra.mxu0 0.0
  %90 = vmatprep.subr.mxu0 0.0
  %91 = vmatpush1.msra.mxu0 0.0
  %92 = vmatprep.subr.mxu0 0.0
  %93 = vmatpush1.msra.mxu0 0.0
  %94 = vmatprep.subr.mxu0 0.0
  %95 = vmatpush1.msra.mxu0 0.0
  %96 = vmatprep.subr.mxu0 0.0
  %97 = vmatpush1.msra.mxu0 0.0
  %98 = vmatprep.subr.mxu0 0.0
  %99 = vmatpush1.msra.mxu0 0.0
  %100 = vmatprep.subr.mxu0 0.0
  %101 = vmatpush1.msra.mxu0 0.0
  %102 = vmatprep.subr.mxu0 0.0
  %103 = vmatpush1.msra.mxu0 0.0
  %104 = vmatprep.subr.mxu0 0.0
  %105 = vmatpush1.msra.mxu0 0.0
  %106 = vmatprep.subr.mxu0 0.0
  %107 = vmatpush1.msra.mxu0 0.0
  %108 = vmatprep.subr.mxu0 0.0
  %109 = vmatpush1.msra.mxu0 0.0
  %110 = vmatprep.subr.mxu0 0.0
  %111 = vmatpush1.msra.mxu0 0.0
  %112 = vmatprep.subr.mxu0 0.0
  %113 = vmatpush1.msra.mxu0 0.0
  %114 = vmatprep.subr.mxu0 0.0
  %115 = vmatpush1.msra.mxu0 0.0
  %116 = vmatprep.mubr.f32.mxu0 0.0
  %117 = vmatmul.mubr.f32.gmra.mrb[0].mxu0 %v41
  %v118 = vpop.f32.mrb[0].mxu0
  %v119 = vadd.f32 0.0, %v118
  %v120 = vpop.f32.mrb[0].mxu0
  %121 = vmatprep.mubr.f32.mxu0 0.0
  %122 = vmatmul.mubr.f32.gmra.mrb[0].mxu0 %v44
  %v123 = vpop.f32.mrb[0].mxu0
  %v124 = vadd.f32 0.0, %v123
  %v125 = vpop.f32.mrb[0].mxu0
  %126 = vmatprep.mubr.f32.mxu0 0.0
  %127 = vmatmul.mubr.f32.gmra.mrb[0].mxu0 %v47
  %v128 = vpop.f32.mrb[0].mxu0
  %v129 = vadd.f32 0.0, %v128
  %v130 = vpop.f32.mrb[0].mxu0
  %131 = vmatprep.mubr.f32.mxu0 0.0
  %132 = vmatmul.mubr.f32.gmra.mrb[0].mxu0 %v50
  %v133 = vpop.f32.mrb[0].mxu0
  %v134 = vadd.f32 0.0, %v133
  %v135 = vpop.f32.mrb[0].mxu0
  %136 = vdwg.mxu0
  %v137 = vrot.slane %v119, 7
  %v138 = vrot.slane %v124, 7
  %v139 = vrot.slane %v129, 7
  %v140 = vrot.slane %v134, 7
  %v141 = vlaneseq
  %v142 = vshrl.u32 %v141, 7
  %vm143 = vcmp.lt.s32.totalorder %v142, 1
  %v144 = vsel %vm143, %v139, %v140
  %v145 = vsel %vm143, %v138, %v139
  %v146 = vsel %vm143, %v137, %v138
  %v147 = vsel %vm143, %v140, %v137
  %149 = vset.pattern.permute.xlu0 0
  %150 = vperm.xlu0 %149, %v27
  %v151 = vpop.permute.xlu0 %150
  %154 = vset.pattern.permute.xlu0 0
  %155 = vperm.xlu0 %154, %v28
  %v156 = vpop.permute.xlu0 %155
  %159 = vset.pattern.permute.xlu0 0
  %160 = vperm.xlu0 %159, %v29
  %v161 = vpop.permute.xlu0 %160
  %164 = vset.pattern.permute.xlu0 0
  %165 = vperm.xlu0 %164, %v30
  %v166 = vpop.permute.xlu0 %165
  %v168 = vmul.f32 %v151, %v147
  %v169 = vmul.f32 %v156, %v146
  %v170 = vmul.f32 %v161, %v145
  %v171 = vmul.f32 %v166, %v144
  %176 = vrot.lane.b32.xlu0 %v168, 32
  %v177 = vpop.permute.xlu0 %176
  %178 = vrot.lane.b32.xlu0 %v169, 32
  %v179 = vpop.permute.xlu0 %178
  %180 = vrot.lane.b32.xlu0 %v170, 32
  %v181 = vpop.permute.xlu0 %180
  %182 = vrot.lane.b32.xlu0 %v171, 32
  %v183 = vpop.permute.xlu0 %182
  %v188 = vadd.f32 %v119, %v177
  %v189 = vadd.f32 %v124, %v179
  %v190 = vadd.f32 %v129, %v181
  %v191 = vadd.f32 %v134, %v183
  %196 = vrot.lane.b32.xlu0 %v119, 64
  %v197 = vpop.permute.xlu0 %196
  %198 = vrot.lane.b32.xlu0 %v124, 64
  %v199 = vpop.permute.xlu0 %198
  %200 = vrot.lane.b32.xlu0 %v129, 64
  %v201 = vpop.permute.xlu0 %200
  %202 = vrot.lane.b32.xlu0 %v134, 64
  %v203 = vpop.permute.xlu0 %202
  %v208 = vrot.slane %v197, 1
  %v209 = vrot.slane %v199, 1
  %v210 = vrot.slane %v201, 1
  %v211 = vrot.slane %v203, 1
  %vm212 = vcmp.lt.s32.totalorder %v142, 7
  %v213 = vsel %vm212, %v210, %v211
  %v214 = vsel %vm212, %v209, %v210
  %v215 = vsel %vm212, %v208, %v209
  %v216 = vsel %vm212, %v211, %v208
  %217 = vset.pattern.permute.xlu0 1
  %218 = vperm.xlu0 %217, %v27
  %v219 = vpop.permute.xlu0 %218
  %221 = vset.pattern.permute.xlu0 1
  %222 = vperm.xlu0 %221, %v28
  %v223 = vpop.permute.xlu0 %222
  %225 = vset.pattern.permute.xlu0 1
  %226 = vperm.xlu0 %225, %v29
  %v227 = vpop.permute.xlu0 %226
  %229 = vset.pattern.permute.xlu0 1
  %230 = vperm.xlu0 %229, %v30
  %v231 = vpop.permute.xlu0 %230
  %v233 = vmul.f32 %v219, %v215
  %v234 = vmul.f32 %v223, %v214
  %v235 = vmul.f32 %v227, %v213
  %v236 = vmul.f32 %v231, %v216
  %241 = vrot.lane.b32.xlu0 %v233, 32
  %v242 = vpop.permute.xlu0 %241
  %243 = vrot.lane.b32.xlu0 %v234, 32
  %v244 = vpop.permute.xlu0 %243
  %245 = vrot.lane.b32.xlu0 %v235, 32
  %v246 = vpop.permute.xlu0 %245
  %247 = vrot.lane.b32.xlu0 %v236, 32
  %v248 = vpop.permute.xlu0 %247
  %v253 = vadd.f32 %v188, %v242
  %v254 = vadd.f32 %v189, %v244
  %v255 = vadd.f32 %v190, %v246
  %v256 = vadd.f32 %v191, %v248
  %v257 = vlaneseq
  %v258 = vshrl.u32 %v257, 7
  %v259 = vsub.s32 0, %v258
  %v260 = vrot.slane %v17, %v259
  %262 = vrot.lane.b32.xlu0 %v260, 32
  %v263 = vpop.permute.xlu0 %262
  %v265 = vadd.f32 %v253, %v263
  %v266 = vadd.f32 %v254, %v263
  %v267 = vadd.f32 %v255, %v263
  %v268 = vadd.f32 %v256, %v263
  %v269 = vmax.f32 %v265, 0.0
  %v270 = vmax.f32 %v266, 0.0
  %v271 = vmax.f32 %v267, 0.0
  %v272 = vmax.f32 %v268, 0.0
  %277 = vrot.lane.b32.xlu0 %v269, 96
  %v278 = vpop.permute.xlu0 %277
  %279 = vrot.lane.b32.xlu0 %v270, 96
  %v280 = vpop.permute.xlu0 %279
  %281 = vrot.lane.b32.xlu0 %v271, 96
  %v282 = vpop.permute.xlu0 %281
  %283 = vrot.lane.b32.xlu0 %v272, 96
  %v284 = vpop.permute.xlu0 %283
  %v289 = vsel %vm39, %v278, 0.0
  %290 = vadd.xlane.f32.xlu0 %v289
  %v291 = vpop.xlane.xlu0 %290
  %v292 = vsel %vm39, %v280, 0.0
  %293 = vadd.xlane.f32.xlu0 %v292
  %v294 = vpop.xlane.xlu0 %293
  %v295 = vsel %vm39, %v282, 0.0
  %296 = vadd.xlane.f32.xlu0 %v295
  %v297 = vpop.xlane.xlu0 %296
  %v298 = vsel %vm39, %v284, 0.0
  %299 = vadd.xlane.f32.xlu0 %v298
  %v300 = vpop.xlane.xlu0 %299
  %v301 = vrcp.pop 32.0
  %v302 = vmul.f32 %v291, %v301
  %v303 = vmul.f32 %v294, %v301
  %v304 = vmul.f32 %v297, %v301
  %v305 = vmul.f32 %v300, %v301
  %v306 = vmul.f32 %v269, %v269
  %v307 = vmul.f32 %v270, %v270
  %v308 = vmul.f32 %v271, %v271
  %v309 = vmul.f32 %v272, %v272
  %314 = vrot.lane.b32.xlu0 %v306, 96
  %v315 = vpop.permute.xlu0 %314
  %316 = vrot.lane.b32.xlu0 %v307, 96
  %v317 = vpop.permute.xlu0 %316
  %318 = vrot.lane.b32.xlu0 %v308, 96
  %v319 = vpop.permute.xlu0 %318
  %320 = vrot.lane.b32.xlu0 %v309, 96
  %v321 = vpop.permute.xlu0 %320
  %v326 = vsel %vm39, %v315, 0.0
  %327 = vadd.xlane.f32.xlu0 %v326
  %v328 = vpop.xlane.xlu0 %327
  %v329 = vsel %vm39, %v317, 0.0
  %330 = vadd.xlane.f32.xlu0 %v329
  %v331 = vpop.xlane.xlu0 %330
  %v332 = vsel %vm39, %v319, 0.0
  %333 = vadd.xlane.f32.xlu0 %v332
  %v334 = vpop.xlane.xlu0 %333
  %v335 = vsel %vm39, %v321, 0.0
  %336 = vadd.xlane.f32.xlu0 %v335
  %v337 = vpop.xlane.xlu0 %336
  %v338 = vmul.f32 %v328, %v301
  %v339 = vmul.f32 %v331, %v301
  %v340 = vmul.f32 %v334, %v301
  %v341 = vmul.f32 %v337, %v301
  %v342 = vmul.f32 %v302, %v302
  %v343 = vmul.f32 %v303, %v303
  %v344 = vmul.f32 %v304, %v304
  %v345 = vmul.f32 %v305, %v305
  %v346 = vsub.f32 %v338, %v342
  %v347 = vsub.f32 %v339, %v343
  %v348 = vsub.f32 %v340, %v344
  %v349 = vsub.f32 %v341, %v345
  %v350 = vmax.f32 %v346, 0.0
  %v351 = vmax.f32 %v347, 0.0
  %v352 = vmax.f32 %v348, 0.0
  %v353 = vmax.f32 %v349, 0.0
  %v354 = vadd.f32 %v350, 1e-05
  %v355 = vadd.f32 %v351, 1e-05
  %v356 = vadd.f32 %v352, 1e-05
  %v357 = vadd.f32 %v353, 1e-05
  %v358 = vrsqrt.pop %v354
  %v359 = vrsqrt.pop %v355
  %v360 = vrsqrt.pop %v356
  %v361 = vrsqrt.pop %v357
  %v362 = vlaneseq
  %v363 = vshrl.u32 %v362, 7
  %v364 = vsub.s32 0, %v363
  %v365 = vrot.slane %v18, %v364
  %v366 = vmul.f32 %v365, %v358
  %v367 = vmul.f32 %v365, %v359
  %v368 = vmul.f32 %v365, %v360
  %v369 = vmul.f32 %v365, %v361
  %374 = vrot.lane.b32.xlu0 %v366, 32
  %v375 = vpop.permute.xlu0 %374
  %376 = vrot.lane.b32.xlu0 %v367, 32
  %v377 = vpop.permute.xlu0 %376
  %378 = vrot.lane.b32.xlu0 %v368, 32
  %v379 = vpop.permute.xlu0 %378
  %380 = vrot.lane.b32.xlu0 %v369, 32
  %v381 = vpop.permute.xlu0 %380
  %v386 = vmul.f32 %v269, %v375
  %v387 = vmul.f32 %v270, %v377
  %v388 = vmul.f32 %v271, %v379
  %v389 = vmul.f32 %v272, %v381
  %v390 = vmul.f32 %v302, %v366
  %v391 = vmul.f32 %v303, %v367
  %v392 = vmul.f32 %v304, %v368
  %v393 = vmul.f32 %v305, %v369
  %v394 = vlaneseq
  %v395 = vshrl.u32 %v394, 7
  %v396 = vsub.s32 0, %v395
  %v397 = vrot.slane %v19, %v396
  %v398 = vsub.f32 %v397, %v390
  %v399 = vsub.f32 %v397, %v391
  %v400 = vsub.f32 %v397, %v392
  %v401 = vsub.f32 %v397, %v393
  %406 = vrot.lane.b32.xlu0 %v398, 32
  %v407 = vpop.permute.xlu0 %406
  %408 = vrot.lane.b32.xlu0 %v399, 32
  %v409 = vpop.permute.xlu0 %408
  %410 = vrot.lane.b32.xlu0 %v400, 32
  %v411 = vpop.permute.xlu0 %410
  %412 = vrot.lane.b32.xlu0 %v401, 32
  %v413 = vpop.permute.xlu0 %412
  %v418 = vadd.f32 %v386, %v407
  %v419 = vadd.f32 %v387, %v409
  %v420 = vadd.f32 %v388, %v411
  %v421 = vadd.f32 %v389, %v413
  %v422 = vld [vmem:[%s2] sm:$0xff]
  %v423 = vld [vmem:[%s2 + $0x8] sm:$0xff]
  %v424 = vld [vmem:[%s2 + $0x10] sm:$0xff]
  %v425 = vld [vmem:[%s2 + $0x18] sm:$0xff]
  %430 = vrot.lane.b32.xlu0 %v418, 96
  %v431 = vpop.permute.xlu0 %430
  %432 = vrot.lane.b32.xlu0 %v419, 96
  %v433 = vpop.permute.xlu0 %432
  %434 = vrot.lane.b32.xlu0 %v420, 96
  %v435 = vpop.permute.xlu0 %434
  %436 = vrot.lane.b32.xlu0 %v421, 96
  %v437 = vpop.permute.xlu0 %436
  %v438 = vsel %vm39, %v431, 0
  %v440 = vsel %vm39, %v433, 0
  %v442 = vsel %vm39, %v435, 0
  %v444 = vsel %vm39, %v437, 0
  %446 = vmatprep.subr.mxu0 0.0
  %447 = vmatpush1.msra.mxu0 %v422
  %448 = vmatprep.subr.mxu0 0.0
  %449 = vmatpush1.msra.mxu0 %v423
  %450 = vmatprep.subr.mxu0 0.0
  %451 = vmatpush1.msra.mxu0 %v424
  %452 = vmatprep.subr.mxu0 0.0
  %453 = vmatpush1.msra.mxu0 %v425
  %454 = vmatprep.subr.mxu0 0.0
  %455 = vmatpush1.msra.mxu0 0.0
  %456 = vmatprep.subr.mxu0 0.0
  %457 = vmatpush1.msra.mxu0 0.0
  %458 = vmatprep.subr.mxu0 0.0
  %459 = vmatpush1.msra.mxu0 0.0
  %460 = vmatprep.subr.mxu0 0.0
  %461 = vmatpush1.msra.mxu0 0.0
  %462 = vmatprep.subr.mxu0 0.0
  %463 = vmatpush1.msra.mxu0 0.0
  %464 = vmatprep.subr.mxu0 0.0
  %465 = vmatpush1.msra.mxu0 0.0
  %466 = vmatprep.subr.mxu0 0.0
  %467 = vmatpush1.msra.mxu0 0.0
  %468 = vmatprep.subr.mxu0 0.0
  %469 = vmatpush1.msra.mxu0 0.0
  %470 = vmatprep.subr.mxu0 0.0
  %471 = vmatpush1.msra.mxu0 0.0
  %472 = vmatprep.subr.mxu0 0.0
  %473 = vmatpush1.msra.mxu0 0.0
  %474 = vmatprep.subr.mxu0 0.0
  %475 = vmatpush1.msra.mxu0 0.0
  %476 = vmatprep.subr.mxu0 0.0
  %477 = vmatpush1.msra.mxu0 0.0
  %478 = vmatprep.subr.mxu0 0.0
  %479 = vmatpush1.msra.mxu0 0.0
  %480 = vmatprep.subr.mxu0 0.0
  %481 = vmatpush1.msra.mxu0 0.0
  %482 = vmatprep.subr.mxu0 0.0
  %483 = vmatpush1.msra.mxu0 0.0
  %484 = vmatprep.subr.mxu0 0.0
  %485 = vmatpush1.msra.mxu0 0.0
  %486 = vmatprep.subr.mxu0 0.0
  %487 = vmatpush1.msra.mxu0 0.0
  %488 = vmatprep.subr.mxu0 0.0
  %489 = vmatpush1.msra.mxu0 0.0
  %490 = vmatprep.subr.mxu0 0.0
  %491 = vmatpush1.msra.mxu0 0.0
  %492 = vmatprep.subr.mxu0 0.0
  %493 = vmatpush1.msra.mxu0 0.0
  %494 = vmatprep.subr.mxu0 0.0
  %495 = vmatpush1.msra.mxu0 0.0
  %496 = vmatprep.subr.mxu0 0.0
  %497 = vmatpush1.msra.mxu0 0.0
  %498 = vmatprep.subr.mxu0 0.0
  %499 = vmatpush1.msra.mxu0 0.0
  %500 = vmatprep.subr.mxu0 0.0
  %501 = vmatpush1.msra.mxu0 0.0
  %502 = vmatprep.subr.mxu0 0.0
  %503 = vmatpush1.msra.mxu0 0.0
  %504 = vmatprep.subr.mxu0 0.0
  %505 = vmatpush1.msra.mxu0 0.0
  %506 = vmatprep.subr.mxu0 0.0
  %507 = vmatpush1.msra.mxu0 0.0
  %508 = vmatprep.subr.mxu0 0.0
  %509 = vmatpush1.msra.mxu0 0.0
  %510 = vmatprep.mubr.f32.mxu0 0.0
  %511 = vmatmul.mubr.f32.gmra.mrb[0].mxu0 %v438
  %v512 = vpop.f32.mrb[0].mxu0
  %v513 = vadd.f32 0.0, %v512
  %v514 = vpop.f32.mrb[0].mxu0
  %515 = vmatprep.mubr.f32.mxu0 0.0
  %516 = vmatmul.mubr.f32.gmra.mrb[0].mxu0 %v440
  %v517 = vpop.f32.mrb[0].mxu0
  %v518 = vadd.f32 0.0, %v517
  %v519 = vpop.f32.mrb[0].mxu0
  %520 = vmatprep.mubr.f32.mxu0 0.0
  %521 = vmatmul.mubr.f32.gmra.mrb[0].mxu0 %v442
  %v522 = vpop.f32.mrb[0].mxu0
  %v523 = vadd.f32 0.0, %v522
  %v524 = vpop.f32.mrb[0].mxu0
  %525 = vmatprep.mubr.f32.mxu0 0.0
  %526 = vmatmul.mubr.f32.gmra.mrb[0].mxu0 %v444
  %v527 = vpop.f32.mrb[0].mxu0
  %v528 = vadd.f32 0.0, %v527
  %v529 = vpop.f32.mrb[0].mxu0
  %530 = vdwg.mxu0
  %v531 = vrot.slane %v513, 7
  %v532 = vrot.slane %v518, 7
  %v533 = vrot.slane %v523, 7
  %v534 = vrot.slane %v528, 7
  %v535 = vsel %vm143, %v533, %v534
  %v536 = vsel %vm143, %v532, %v533
  %v537 = vsel %vm143, %v531, %v532
  %v538 = vsel %vm143, %v534, %v531
  %v539 = vmul.f32 %v151, %v538
  %v540 = vmul.f32 %v156, %v537
  %v541 = vmul.f32 %v161, %v536
  %v542 = vmul.f32 %v166, %v535
  %547 = vrot.lane.b32.xlu0 %v539, 32
  %v548 = vpop.permute.xlu0 %547
  %549 = vrot.lane.b32.xlu0 %v540, 32
  %v550 = vpop.permute.xlu0 %549
  %551 = vrot.lane.b32.xlu0 %v541, 32
  %v552 = vpop.permute.xlu0 %551
  %553 = vrot.lane.b32.xlu0 %v542, 32
  %v554 = vpop.permute.xlu0 %553
  %v559 = vadd.f32 %v513, %v548
  %v560 = vadd.f32 %v518, %v550
  %v561 = vadd.f32 %v523, %v552
  %v562 = vadd.f32 %v528, %v554
  %567 = vrot.lane.b32.xlu0 %v513, 64
  %v568 = vpop.permute.xlu0 %567
  %569 = vrot.lane.b32.xlu0 %v518, 64
  %v570 = vpop.permute.xlu0 %569
  %571 = vrot.lane.b32.xlu0 %v523, 64
  %v572 = vpop.permute.xlu0 %571
  %573 = vrot.lane.b32.xlu0 %v528, 64
  %v574 = vpop.permute.xlu0 %573
  %v579 = vrot.slane %v568, 1
  %v580 = vrot.slane %v570, 1
  %v581 = vrot.slane %v572, 1
  %v582 = vrot.slane %v574, 1
  %v583 = vsel %vm212, %v581, %v582
  %v584 = vsel %vm212, %v580, %v581
  %v585 = vsel %vm212, %v579, %v580
  %v586 = vsel %vm212, %v582, %v579
  %v587 = vmul.f32 %v219, %v585
  %v588 = vmul.f32 %v223, %v584
  %v589 = vmul.f32 %v227, %v583
  %v590 = vmul.f32 %v231, %v586
  %595 = vrot.lane.b32.xlu0 %v587, 32
  %v596 = vpop.permute.xlu0 %595
  %597 = vrot.lane.b32.xlu0 %v588, 32
  %v598 = vpop.permute.xlu0 %597
  %599 = vrot.lane.b32.xlu0 %v589, 32
  %v600 = vpop.permute.xlu0 %599
  %601 = vrot.lane.b32.xlu0 %v590, 32
  %v602 = vpop.permute.xlu0 %601
  %v607 = vadd.f32 %v559, %v596
  %v608 = vadd.f32 %v560, %v598
  %v609 = vadd.f32 %v561, %v600
  %v610 = vadd.f32 %v562, %v602
  %v611 = vlaneseq
  %v612 = vshrl.u32 %v611, 7
  %v613 = vsub.s32 0, %v612
  %v614 = vrot.slane %v20, %v613
  %616 = vrot.lane.b32.xlu0 %v614, 32
  %v617 = vpop.permute.xlu0 %616
  %v619 = vadd.f32 %v607, %v617
  %v620 = vadd.f32 %v608, %v617
  %v621 = vadd.f32 %v609, %v617
  %v622 = vadd.f32 %v610, %v617
  %v623 = vmax.f32 %v619, 0.0
  %v624 = vmax.f32 %v620, 0.0
  %v625 = vmax.f32 %v621, 0.0
  %v626 = vmax.f32 %v622, 0.0
  %631 = vrot.lane.b32.xlu0 %v623, 96
  %v632 = vpop.permute.xlu0 %631
  %633 = vrot.lane.b32.xlu0 %v624, 96
  %v634 = vpop.permute.xlu0 %633
  %635 = vrot.lane.b32.xlu0 %v625, 96
  %v636 = vpop.permute.xlu0 %635
  %637 = vrot.lane.b32.xlu0 %v626, 96
  %v638 = vpop.permute.xlu0 %637
  %v643 = vsel %vm39, %v632, 0.0
  %644 = vadd.xlane.f32.xlu0 %v643
  %v645 = vpop.xlane.xlu0 %644
  %v646 = vsel %vm39, %v634, 0.0
  %647 = vadd.xlane.f32.xlu0 %v646
  %v648 = vpop.xlane.xlu0 %647
  %v649 = vsel %vm39, %v636, 0.0
  %650 = vadd.xlane.f32.xlu0 %v649
  %v651 = vpop.xlane.xlu0 %650
  %v652 = vsel %vm39, %v638, 0.0
  %653 = vadd.xlane.f32.xlu0 %v652
  %v654 = vpop.xlane.xlu0 %653
  %v655 = vmul.f32 %v645, %v301
  %v656 = vmul.f32 %v648, %v301
  %v657 = vmul.f32 %v651, %v301
  %v658 = vmul.f32 %v654, %v301
  %v659 = vmul.f32 %v623, %v623
  %v660 = vmul.f32 %v624, %v624
  %v661 = vmul.f32 %v625, %v625
  %v662 = vmul.f32 %v626, %v626
  %667 = vrot.lane.b32.xlu0 %v659, 96
  %v668 = vpop.permute.xlu0 %667
  %669 = vrot.lane.b32.xlu0 %v660, 96
  %v670 = vpop.permute.xlu0 %669
  %671 = vrot.lane.b32.xlu0 %v661, 96
  %v672 = vpop.permute.xlu0 %671
  %673 = vrot.lane.b32.xlu0 %v662, 96
  %v674 = vpop.permute.xlu0 %673
  %v679 = vsel %vm39, %v668, 0.0
  %680 = vadd.xlane.f32.xlu0 %v679
  %v681 = vpop.xlane.xlu0 %680
  %v682 = vsel %vm39, %v670, 0.0
  %683 = vadd.xlane.f32.xlu0 %v682
  %v684 = vpop.xlane.xlu0 %683
  %v685 = vsel %vm39, %v672, 0.0
  %686 = vadd.xlane.f32.xlu0 %v685
  %v687 = vpop.xlane.xlu0 %686
  %v688 = vsel %vm39, %v674, 0.0
  %689 = vadd.xlane.f32.xlu0 %v688
  %v690 = vpop.xlane.xlu0 %689
  %v691 = vmul.f32 %v681, %v301
  %v692 = vmul.f32 %v684, %v301
  %v693 = vmul.f32 %v687, %v301
  %v694 = vmul.f32 %v690, %v301
  %v695 = vmul.f32 %v655, %v655
  %v696 = vmul.f32 %v656, %v656
  %v697 = vmul.f32 %v657, %v657
  %v698 = vmul.f32 %v658, %v658
  %v699 = vsub.f32 %v691, %v695
  %v700 = vsub.f32 %v692, %v696
  %v701 = vsub.f32 %v693, %v697
  %v702 = vsub.f32 %v694, %v698
  %v703 = vmax.f32 %v699, 0.0
  %v704 = vmax.f32 %v700, 0.0
  %v705 = vmax.f32 %v701, 0.0
  %v706 = vmax.f32 %v702, 0.0
  %v707 = vadd.f32 %v703, 1e-05
  %v708 = vadd.f32 %v704, 1e-05
  %v709 = vadd.f32 %v705, 1e-05
  %v710 = vadd.f32 %v706, 1e-05
  %v711 = vrsqrt.pop %v707
  %v712 = vrsqrt.pop %v708
  %v713 = vrsqrt.pop %v709
  %v714 = vrsqrt.pop %v710
  %v715 = vlaneseq
  %v716 = vshrl.u32 %v715, 7
  %v717 = vsub.s32 0, %v716
  %v718 = vrot.slane %v21, %v717
  %v719 = vmul.f32 %v718, %v711
  %v720 = vmul.f32 %v718, %v712
  %v721 = vmul.f32 %v718, %v713
  %v722 = vmul.f32 %v718, %v714
  %727 = vrot.lane.b32.xlu0 %v719, 32
  %v728 = vpop.permute.xlu0 %727
  %729 = vrot.lane.b32.xlu0 %v720, 32
  %v730 = vpop.permute.xlu0 %729
  %731 = vrot.lane.b32.xlu0 %v721, 32
  %v732 = vpop.permute.xlu0 %731
  %733 = vrot.lane.b32.xlu0 %v722, 32
  %v734 = vpop.permute.xlu0 %733
  %v739 = vmul.f32 %v623, %v728
  %v740 = vmul.f32 %v624, %v730
  %v741 = vmul.f32 %v625, %v732
  %v742 = vmul.f32 %v626, %v734
  %v743 = vmul.f32 %v655, %v719
  %v744 = vmul.f32 %v656, %v720
  %v745 = vmul.f32 %v657, %v721
  %v746 = vmul.f32 %v658, %v722
  %v747 = vlaneseq
  %v748 = vshrl.u32 %v747, 7
  %v749 = vsub.s32 0, %v748
  %v750 = vrot.slane %v22, %v749
  %v751 = vsub.f32 %v750, %v743
  %v752 = vsub.f32 %v750, %v744
  %v753 = vsub.f32 %v750, %v745
  %v754 = vsub.f32 %v750, %v746
  %759 = vrot.lane.b32.xlu0 %v751, 32
  %v760 = vpop.permute.xlu0 %759
  %761 = vrot.lane.b32.xlu0 %v752, 32
  %v762 = vpop.permute.xlu0 %761
  %763 = vrot.lane.b32.xlu0 %v753, 32
  %v764 = vpop.permute.xlu0 %763
  %765 = vrot.lane.b32.xlu0 %v754, 32
  %v766 = vpop.permute.xlu0 %765
  %v771 = vadd.f32 %v739, %v760
  %v772 = vadd.f32 %v740, %v762
  %v773 = vadd.f32 %v741, %v764
  %v774 = vadd.f32 %v742, %v766
  %779 = vrot.lane.b32.xlu0 %v771, 96
  %v780 = vpop.permute.xlu0 %779
  %781 = vrot.lane.b32.xlu0 %v772, 96
  %v782 = vpop.permute.xlu0 %781
  %783 = vrot.lane.b32.xlu0 %v773, 96
  %v784 = vpop.permute.xlu0 %783
  %785 = vrot.lane.b32.xlu0 %v774, 96
  %v786 = vpop.permute.xlu0 %785
  %v787 = vsel %vm39, %v780, 0
  %v789 = vsel %vm39, %v782, 0
  %v791 = vsel %vm39, %v784, 0
  %v793 = vsel %vm39, %v786, 0
  %795 = vmatprep.subr.mxu0 0.0
  %796 = vmatpush1.msra.mxu0 1.0
  %797 = vmatprep.subr.mxu0 0.0
  %798 = vmatpush1.msra.mxu0 1.0
  %799 = vmatprep.subr.mxu0 0.0
  %800 = vmatpush1.msra.mxu0 1.0
  %801 = vmatprep.subr.mxu0 0.0
  %802 = vmatpush1.msra.mxu0 1.0
  %803 = vmatprep.subr.mxu0 0.0
  %804 = vmatpush1.msra.mxu0 0.0
  %805 = vmatprep.subr.mxu0 0.0
  %806 = vmatpush1.msra.mxu0 0.0
  %807 = vmatprep.subr.mxu0 0.0
  %808 = vmatpush1.msra.mxu0 0.0
  %809 = vmatprep.subr.mxu0 0.0
  %810 = vmatpush1.msra.mxu0 0.0
  %811 = vmatprep.subr.mxu0 0.0
  %812 = vmatpush1.msra.mxu0 0.0
  %813 = vmatprep.subr.mxu0 0.0
  %814 = vmatpush1.msra.mxu0 0.0
  %815 = vmatprep.subr.mxu0 0.0
  %816 = vmatpush1.msra.mxu0 0.0
  %817 = vmatprep.subr.mxu0 0.0
  %818 = vmatpush1.msra.mxu0 0.0
  %819 = vmatprep.subr.mxu0 0.0
  %820 = vmatpush1.msra.mxu0 0.0
  %821 = vmatprep.subr.mxu0 0.0
  %822 = vmatpush1.msra.mxu0 0.0
  %823 = vmatprep.subr.mxu0 0.0
  %824 = vmatpush1.msra.mxu0 0.0
  %825 = vmatprep.subr.mxu0 0.0
  %826 = vmatpush1.msra.mxu0 0.0
  %827 = vmatprep.subr.mxu0 0.0
  %828 = vmatpush1.msra.mxu0 0.0
  %829 = vmatprep.subr.mxu0 0.0
  %830 = vmatpush1.msra.mxu0 0.0
  %831 = vmatprep.subr.mxu0 0.0
  %832 = vmatpush1.msra.mxu0 0.0
  %833 = vmatprep.subr.mxu0 0.0
  %834 = vmatpush1.msra.mxu0 0.0
  %835 = vmatprep.subr.mxu0 0.0
  %836 = vmatpush1.msra.mxu0 0.0
  %837 = vmatprep.subr.mxu0 0.0
  %838 = vmatpush1.msra.mxu0 0.0
  %839 = vmatprep.subr.mxu0 0.0
  %840 = vmatpush1.msra.mxu0 0.0
  %841 = vmatprep.subr.mxu0 0.0
  %842 = vmatpush1.msra.mxu0 0.0
  %843 = vmatprep.subr.mxu0 0.0
  %844 = vmatpush1.msra.mxu0 0.0
  %845 = vmatprep.subr.mxu0 0.0
  %846 = vmatpush1.msra.mxu0 0.0
  %847 = vmatprep.subr.mxu0 0.0
  %848 = vmatpush1.msra.mxu0 0.0
  %849 = vmatprep.subr.mxu0 0.0
  %850 = vmatpush1.msra.mxu0 0.0
  %851 = vmatprep.subr.mxu0 0.0
  %852 = vmatpush1.msra.mxu0 0.0
  %853 = vmatprep.subr.mxu0 0.0
  %854 = vmatpush1.msra.mxu0 0.0
  %855 = vmatprep.subr.mxu0 0.0
  %856 = vmatpush1.msra.mxu0 0.0
  %857 = vmatprep.subr.mxu0 0.0
  %858 = vmatpush1.msra.mxu0 0.0
  %859 = vmatprep.mubr.f32.mxu0 0.0
  %860 = vmatmul.mubr.f32.gmra.mrb[0].mxu0 %v787
  %v861 = vpop.f32.mrb[0].mxu0
  %v862 = vadd.f32 0.0, %v861
  %v863 = vpop.f32.mrb[0].mxu0
  %864 = vmatprep.mubr.f32.mxu0 0.0
  %865 = vmatmul.mubr.f32.gmra.mrb[0].mxu0 %v789
  %v866 = vpop.f32.mrb[0].mxu0
  %v867 = vadd.f32 0.0, %v866
  %v868 = vpop.f32.mrb[0].mxu0
  %869 = vmatprep.mubr.f32.mxu0 0.0
  %870 = vmatmul.mubr.f32.gmra.mrb[0].mxu0 %v791
  %v871 = vpop.f32.mrb[0].mxu0
  %v872 = vadd.f32 0.0, %v871
  %v873 = vpop.f32.mrb[0].mxu0
  %874 = vmatprep.mubr.f32.mxu0 0.0
  %875 = vmatmul.mubr.f32.gmra.mrb[0].mxu0 %v793
  %v876 = vpop.f32.mrb[0].mxu0
  %v877 = vadd.f32 0.0, %v876
  %v878 = vpop.f32.mrb[0].mxu0
  %879 = vdwg.mxu0
  %881 = vset.pattern.permute.xlu0 0
  %882 = vperm.xlu0 %881, %v862
  %v883 = vpop.permute.xlu0 %882
  %886 = vset.pattern.permute.xlu0 0
  %887 = vperm.xlu0 %886, %v867
  %v888 = vpop.permute.xlu0 %887
  %891 = vset.pattern.permute.xlu0 0
  %892 = vperm.xlu0 %891, %v872
  %v893 = vpop.permute.xlu0 %892
  %896 = vset.pattern.permute.xlu0 0
  %897 = vperm.xlu0 %896, %v877
  %v898 = vpop.permute.xlu0 %897
  %v900 = vmul.f32 %v883, %v23
  %v901 = vmul.f32 %v888, %v24
  %v902 = vmul.f32 %v893, %v25
  %v903 = vmul.f32 %v898, %v26
  %v905 = vsel %vm39, 1.0, 0
  %907 = vmatprep.subr.mxu0 0.0
  %908 = vmatpush1.msra.mxu0 %v900
  %909 = vmatprep.subr.mxu0 0.0
  %910 = vmatpush1.msra.mxu0 %v901
  %911 = vmatprep.subr.mxu0 0.0
  %912 = vmatpush1.msra.mxu0 %v902
  %913 = vmatprep.subr.mxu0 0.0
  %914 = vmatpush1.msra.mxu0 %v903
  %915 = vmatprep.subr.mxu0 0.0
  %916 = vmatpush1.msra.mxu0 0.0
  %917 = vmatprep.subr.mxu0 0.0
  %918 = vmatpush1.msra.mxu0 0.0
  %919 = vmatprep.subr.mxu0 0.0
  %920 = vmatpush1.msra.mxu0 0.0
  %921 = vmatprep.subr.mxu0 0.0
  %922 = vmatpush1.msra.mxu0 0.0
  %923 = vmatprep.subr.mxu0 0.0
  %924 = vmatpush1.msra.mxu0 0.0
  %925 = vmatprep.subr.mxu0 0.0
  %926 = vmatpush1.msra.mxu0 0.0
  %927 = vmatprep.subr.mxu0 0.0
  %928 = vmatpush1.msra.mxu0 0.0
  %929 = vmatprep.subr.mxu0 0.0
  %930 = vmatpush1.msra.mxu0 0.0
  %931 = vmatprep.subr.mxu0 0.0
  %932 = vmatpush1.msra.mxu0 0.0
  %933 = vmatprep.subr.mxu0 0.0
  %934 = vmatpush1.msra.mxu0 0.0
  %935 = vmatprep.subr.mxu0 0.0
  %936 = vmatpush1.msra.mxu0 0.0
  %937 = vmatprep.subr.mxu0 0.0
  %938 = vmatpush1.msra.mxu0 0.0
  %939 = vmatprep.subr.mxu0 0.0
  %940 = vmatpush1.msra.mxu0 0.0
  %941 = vmatprep.subr.mxu0 0.0
  %942 = vmatpush1.msra.mxu0 0.0
  %943 = vmatprep.subr.mxu0 0.0
  %944 = vmatpush1.msra.mxu0 0.0
  %945 = vmatprep.subr.mxu0 0.0
  %946 = vmatpush1.msra.mxu0 0.0
  %947 = vmatprep.subr.mxu0 0.0
  %948 = vmatpush1.msra.mxu0 0.0
  %949 = vmatprep.subr.mxu0 0.0
  %950 = vmatpush1.msra.mxu0 0.0
  %951 = vmatprep.subr.mxu0 0.0
  %952 = vmatpush1.msra.mxu0 0.0
  %953 = vmatprep.subr.mxu0 0.0
  %954 = vmatpush1.msra.mxu0 0.0
  %955 = vmatprep.subr.mxu0 0.0
  %956 = vmatpush1.msra.mxu0 0.0
  %957 = vmatprep.subr.mxu0 0.0
  %958 = vmatpush1.msra.mxu0 0.0
  %959 = vmatprep.subr.mxu0 0.0
  %960 = vmatpush1.msra.mxu0 0.0
  %961 = vmatprep.subr.mxu0 0.0
  %962 = vmatpush1.msra.mxu0 0.0
  %963 = vmatprep.subr.mxu0 0.0
  %964 = vmatpush1.msra.mxu0 0.0
  %965 = vmatprep.subr.mxu0 0.0
  %966 = vmatpush1.msra.mxu0 0.0
  %967 = vmatprep.subr.mxu0 0.0
  %968 = vmatpush1.msra.mxu0 0.0
  %969 = vmatprep.subr.mxu0 0.0
  %970 = vmatpush1.msra.mxu0 0.0
  %971 = vmatprep.mubr.f32.mxu0 0.0
  %972 = vmatmul.mubr.f32.gmra.mrb[0].mxu0 %v905
  %v973 = vpop.f32.mrb[0].mxu0
  %v974 = vadd.f32 0.0, %v973
  %v975 = vpop.f32.mrb[0].mxu0
  %976 = vdwg.mxu0
  %vm977 = vcmask 253952
  %978 = vst.msk [vmem:[%s4] sm:$0x1] %vm977, %v974
  // Predicated region
  $region18: #{duration_predictor.1} parent=0 // pred_check
    _
  $region19: #{duration_predictor.1} parent=0 // pred_check_branch
    %980 = sbr.rel (0) target = $region21
  $region20: #{duration_predictor.1} parent=0 // pred_region
    _
  $region21: #{duration_predictor.1} parent=0 // pred_fallthru
    _
  // Predicated region
  $region22: #{duration_predictor.1} parent=0 // pred_check
    _
  $region23: #{duration_predictor.1} parent=0 // pred_check_branch
    %982 = sbr.rel (0) target = $region25
  $region24: #{duration_predictor.1} parent=0 // pred_region
    _
  $region25: #{duration_predictor.1} parent=0 // pred_fallthru
    _

</llo_original>
